<compile_context>
chip_gen: v5e
topology: v5e:2x2
jax: 0.10.0
libtpu: 0.0.40
codegen_flags: <defaults>
</compile_context>

<pallas_src>
import functools

import jax
import jax.numpy as jnp
from jax.experimental import pallas as pl
from jax.experimental.pallas import tpu as pltpu


def _convt_kernel(x_ref, w_ref, b_ref, o_ref, *, use_vpu):
    # x_ref: (Cin, tl)   pixels on lanes (lane-dense)
    # w_ref: (C4, Cin)   C4 = 4*Cout, rows ordered (co, kh, kw)
    # b_ref: (C4, 1)
    # o_ref: (C4, tl)
    x = x_ref[...]
    w = w_ref[...]
    b = b_ref[...].astype(jnp.float32)

    if use_vpu:
        # Contraction dim is tiny: 4 broadcast FMAs on the VPU beat an almost
        # empty MXU pass. Unrolled static loop (Cin is small and static).
        xf = x.astype(jnp.float32)
        wf = w.astype(jnp.float32)
        cin = xf.shape[0]
        acc = wf[:, 0:1] * xf[0:1, :]
        for ci in range(1, cin):
            acc = acc + wf[:, ci:ci + 1] * xf[ci:ci + 1, :]
    else:
        acc = jnp.dot(w, x, preferred_element_type=jnp.float32)

    o_ref[...] = (acc + b).astype(o_ref.dtype)


def upsample_conv_transpose2d(x_nchw, weight, bias, *,
                              max_tile=2048,
                              vmem_block_budget=24 * 1024 * 1024):
    """ConvTranspose2d(kernel_size=2, stride=2, padding=0) forward.

    x_nchw : (N, Cin, H, W)
    weight : (Cin, Cout, 2, 2)   (PyTorch ConvTranspose2d weight layout)
    bias   : (Cout,)
    returns: (N, Cout, 2H, 2W)
    """
    N, Cin, H, W = x_nchw.shape
    Cout = weight.shape[1]
    C4 = 4 * Cout
    HW = H * W
    itemsize = jnp.dtype(x_nchw.dtype).itemsize

    # ---- glue: only free reshapes / tiny tensors (no big layout passes) ----
    x_flat = x_nchw.reshape(N, Cin, HW)                              # free
    w_rows = jnp.transpose(weight, (1, 2, 3, 0)).reshape(C4, Cin)    # (co,kh,kw) rows
    b_col = jnp.repeat(bias, 4).reshape(C4, 1)

    # ---- pick a lane tile: big, multiple of 128, within the VMEM budget ----
    per_pixel = (max(Cin, 8) + max(C4, 8)) * itemsize * 2   # double-buffered in+out
    tl_budget = (vmem_block_budget // per_pixel) // 128 * 128
    tl_budget = max(128, min(max_tile, tl_budget))
    if HW <= tl_budget:
        tl, hw_pad = HW, HW
    else:
        tl = tl_budget
        hw_pad = pl.cdiv(HW, tl) * tl
        x_flat = jnp.pad(x_flat, ((0, 0), (0, 0), (0, hw_pad - HW)))
    nt = hw_pad // tl

    # Explicit VMEM limit: blocks (double-buffered) + resident weight/bias,
    # with margin; capped below the v7x physical 64 MiB ceiling.
    vmem_need = (2 * (max(Cin, 8) + max(C4, 8)) * tl * itemsize
                 + 2 * (C4 * max(Cin, 128) + C4 * 128) * 4)
    vmem_limit = int(min(64 * 1024 * 1024,
                         max(16 * 1024 * 1024, int(1.5 * vmem_need))))

    cost = pl.CostEstimate(
        flops=2 * N * HW * Cin * C4,
        transcendentals=0,
        bytes_accessed=(N * HW * Cin * itemsize            # read x
                        + N * HW * C4 * itemsize           # write y
                        + C4 * Cin * 4 + C4 * 4))          # weight + bias

    kernel = functools.partial(_convt_kernel, use_vpu=(Cin <= 8))

    y = pl.pallas_call(
        kernel,
        out_shape=jax.ShapeDtypeStruct((N, C4, hw_pad), x_nchw.dtype),
        grid=(N, nt),
        in_specs=[
            pl.BlockSpec((None, Cin, tl), lambda n, i: (n, 0, i)),   # x: (Cin, tl)
            pl.BlockSpec((C4, Cin), lambda n, i: (0, 0)),            # weights (resident)
            pl.BlockSpec((C4, 1), lambda n, i: (0, 0)),              # bias (resident)
        ],
        out_specs=pl.BlockSpec((None, C4, tl), lambda n, i: (n, 0, i)),
        compiler_params=pltpu.CompilerParams(
            dimension_semantics=("parallel", "parallel"),
            vmem_limit_bytes=vmem_limit),
        cost_estimate=cost,
    )(x_flat, w_rows, b_col)

    # TODO(synk): this final 2x2 NCHW interleave is one XLA layout pass over the
    # output; fusing it in-kernel would need a lane (kw) interleave written to a
    # (N, Cout, H, 2, 2W) view of the output — left to XLA for lowering robustness.
    y = y[:, :, :HW].reshape(N, Cout, 2, 2, H, W)          # (n, co, kh, kw, h, w)
    y = jnp.transpose(y, (0, 1, 4, 2, 5, 3))               # (n, co, h, kh, w, kw)
    return y.reshape(N, Cout, 2 * H, 2 * W)


def _reference(x_nchw, weight, bias):
    # Pure-JAX reference for ConvTranspose2d(k=2, s=2, p=0).
    N, Cin, H, W = x_nchw.shape
    Cout = weight.shape[1]
    y = jnp.einsum('nihw,iokl->nohkwl', x_nchw, weight)     # (N,Cout,H,kh,W,kw)
    y = y.reshape(N, Cout, 2 * H, 2 * W)
    return y + bias[None, :, None, None]


if __name__ == "__main__":
    key = jax.random.PRNGKey(0)
    k_x, k_w, k_b = jax.random.split(key, 3)

    N, Cin, Cout, H, W = 2, 4, 8, 16, 16          # output spatial = 32x32
    x = jax.random.normal(k_x, (N, Cin, H, W), dtype=jnp.float32)
    weight = jax.random.normal(k_w, (Cin, Cout, 2, 2), dtype=jnp.float32) * 0.1
    bias = jax.random.normal(k_b, (Cout,), dtype=jnp.float32) * 0.1

    fn = jax.jit(upsample_conv_transpose2d)
    out = jax.block_until_ready(fn(x, weight, bias))

    ref = _reference(x, weight, bias)
    assert out.shape == (N, Cout, 2 * H, 2 * W), out.shape
    assert jnp.allclose(out, ref, atol=1e-5, rtol=1e-5), "mismatch vs reference"

    print("KERNEL_OK")
</pallas_src>

<mosaic_0001>
module attributes {stable_mosaic.version = 11 : i64} {
  func.func @_convt_kernel(%arg0: i32, %arg1: i32, %arg2: memref<1x4x256xf32, #tpu.memory_space<vmem>>, %arg3: memref<32x4xf32, #tpu.memory_space<vmem>>, %arg4: memref<32x1xf32, #tpu.memory_space<vmem>>, %arg5: memref<1x32x256xf32, #tpu.memory_space<vmem>>) attributes {dimension_semantics = [#tpu.dimension_semantics<parallel>, #tpu.dimension_semantics<parallel>], iteration_bounds = array<i64: 2, 1>, scalar_prefetch = 0 : i64, scratch_operands = 0 : i64, tpu.core_type = #tpu.core_type<tc>, window_params = [{transform_indices = @transform_0, window_bounds = array<i64: 1, 4, 256>}, {pipeline_mode = #tpu.pipeline_mode<synchronous>, transform_indices = @transform_1, window_bounds = array<i64: 32, 4>}, {pipeline_mode = #tpu.pipeline_mode<synchronous>, transform_indices = @transform_2, window_bounds = array<i64: 32, 1>}, {transform_indices = @transform_3, window_bounds = array<i64: 1, 32, 256>}]} {
    %c0 = arith.constant 0 : index
    %c0_0 = arith.constant 0 : index
    %c0_1 = arith.constant 0 : index
    %0 = vector.load %arg2[%c0, %c0_0, %c0_1] : memref<1x4x256xf32, #tpu.memory_space<vmem>>, vector<1x4x256xf32>
    %1 = vector.shape_cast %0 : vector<1x4x256xf32> to vector<4x256xf32>
    %c0_2 = arith.constant 0 : index
    %c0_3 = arith.constant 0 : index
    %2 = vector.load %arg3[%c0_2, %c0_3] : memref<32x4xf32, #tpu.memory_space<vmem>>, vector<32x4xf32>
    %c0_4 = arith.constant 0 : index
    %c0_5 = arith.constant 0 : index
    %3 = vector.load %arg4[%c0_4, %c0_5] : memref<32x1xf32, #tpu.memory_space<vmem>>, vector<32x1xf32>
    %4 = vector.extract_strided_slice %2 {offsets = [0, 0], sizes = [32, 1], strides = [1, 1]} : vector<32x4xf32> to vector<32x1xf32>
    %5 = vector.extract_strided_slice %1 {offsets = [0, 0], sizes = [1, 256], strides = [1, 1]} : vector<4x256xf32> to vector<1x256xf32>
    %6 = vector.broadcast %4 : vector<32x1xf32> to vector<32x256xf32>
    %7 = vector.broadcast %5 : vector<1x256xf32> to vector<32x256xf32>
    %8 = arith.mulf %6, %7 : vector<32x256xf32>
    %9 = vector.extract_strided_slice %2 {offsets = [0, 1], sizes = [32, 1], strides = [1, 1]} : vector<32x4xf32> to vector<32x1xf32>
    %10 = vector.extract_strided_slice %1 {offsets = [1, 0], sizes = [1, 256], strides = [1, 1]} : vector<4x256xf32> to vector<1x256xf32>
    %11 = vector.broadcast %9 : vector<32x1xf32> to vector<32x256xf32>
    %12 = vector.broadcast %10 : vector<1x256xf32> to vector<32x256xf32>
    %13 = arith.mulf %11, %12 : vector<32x256xf32>
    %14 = arith.addf %8, %13 : vector<32x256xf32>
    %15 = vector.extract_strided_slice %2 {offsets = [0, 2], sizes = [32, 1], strides = [1, 1]} : vector<32x4xf32> to vector<32x1xf32>
    %16 = vector.extract_strided_slice %1 {offsets = [2, 0], sizes = [1, 256], strides = [1, 1]} : vector<4x256xf32> to vector<1x256xf32>
    %17 = vector.broadcast %15 : vector<32x1xf32> to vector<32x256xf32>
    %18 = vector.broadcast %16 : vector<1x256xf32> to vector<32x256xf32>
    %19 = arith.mulf %17, %18 : vector<32x256xf32>
    %20 = arith.addf %14, %19 : vector<32x256xf32>
    %21 = vector.extract_strided_slice %2 {offsets = [0, 3], sizes = [32, 1], strides = [1, 1]} : vector<32x4xf32> to vector<32x1xf32>
    %22 = vector.extract_strided_slice %1 {offsets = [3, 0], sizes = [1, 256], strides = [1, 1]} : vector<4x256xf32> to vector<1x256xf32>
    %23 = vector.broadcast %21 : vector<32x1xf32> to vector<32x256xf32>
    %24 = vector.broadcast %22 : vector<1x256xf32> to vector<32x256xf32>
    %25 = arith.mulf %23, %24 : vector<32x256xf32>
    %26 = arith.addf %20, %25 : vector<32x256xf32>
    %27 = vector.broadcast %3 : vector<32x1xf32> to vector<32x256xf32>
    %28 = arith.addf %26, %27 : vector<32x256xf32>
    %c0_6 = arith.constant 0 : index
    %c0_7 = arith.constant 0 : index
    %c0_8 = arith.constant 0 : index
    %29 = vector.load %arg5[%c0_6, %c0_7, %c0_8] : memref<1x32x256xf32, #tpu.memory_space<vmem>>, vector<1x32x256xf32>
    %30 = vector.shape_cast %29 : vector<1x32x256xf32> to vector<32x256xf32>
    %31 = vector.shape_cast %28 : vector<32x256xf32> to vector<1x32x256xf32>
    tpu.vector_store %arg5[%c0_6, %c0_7, %c0_8], %31 {strides = array<i32>} : memref<1x32x256xf32, #tpu.memory_space<vmem>>, vector<1x32x256xf32>,
    return
  }
  func.func @transform_0(%arg0: i32, %arg1: i32) -> (i32, i32, i32) {
    %c0_i32 = arith.constant 0 : i32
    %c0_i32_0 = arith.constant 0 : i32
    return %arg0, %c0_i32, %arg1 : i32, i32, i32
  }
  func.func @transform_1(%arg0: i32, %arg1: i32) -> (i32, i32) {
    %c0_i32 = arith.constant 0 : i32
    %c0_i32_0 = arith.constant 0 : i32
    %c0_i32_1 = arith.constant 0 : i32
    return %c0_i32, %c0_i32_0 : i32, i32
  }
  func.func @transform_2(%arg0: i32, %arg1: i32) -> (i32, i32) {
    %c0_i32 = arith.constant 0 : i32
    %c0_i32_0 = arith.constant 0 : i32
    %c0_i32_1 = arith.constant 0 : i32
    return %c0_i32, %c0_i32_0 : i32, i32
  }
  func.func @transform_3(%arg0: i32, %arg1: i32) -> (i32, i32, i32) {
    %c0_i32 = arith.constant 0 : i32
    %c0_i32_0 = arith.constant 0 : i32
    return %arg0, %c0_i32, %arg1 : i32, i32, i32
  }
}

</mosaic_0001>

<llo_original>
// kernel: upsample_conv_transpose2d.1
$region0: #{upsample_conv_transpose2d.1}
  #allocation0 [shape = 'u32[]', space=smem, size = 0x4, offset = 0x4, fixed_abs, tag = 'smem constant byte address 0x4 - core index']
  #allocation1 [shape = 'u32[72,128]{1,0:T(1,128)}', space=vmem, size = 0x9000, scoped, tag = 'internal scratch']
  %s0 = inlined_call_operand.vmem [shape: f32[2,4,256], index: 0, kind: input, shape index: {}]
  %s1 = inlined_call_operand.vmem [shape: f32[32,4], index: 1, kind: input, shape index: {}]
  %s2 = inlined_call_operand.vmem [shape: f32[32,1], index: 2, kind: input, shape index: {}]
  %s3 = inlined_call_operand.vmem [shape: f32[2,32,256], index: 3, kind: output, shape index: {}]
  %s4 = sld [smem:[#allocation0]]
  $region45: #{upsample_conv_transpose2d.1} parent=0
    _
  %s6 = ssub.s32 1, %s4
  %s7 = scalar_select 0, %s6, %s4
  loop: start=0, step=1, limit=4
  $region2: #{upsample_conv_transpose2d.1} parent=0 // loop_pre_header
    _
  $region3: #{upsample_conv_transpose2d.1} parent=0 // loop_header
    %s9 = sphi 0, %s13
    %p10 = scmp.ge.s32.totalorder %s9, 4
    %s16 = sphi 0, %s28
    %s17 = sphi 0, %s24
    %s18 = sphi 0, %s16
    %s19 = sphi 0, %s17
    %s20 = sphi 0, %s18
    %s21 = sphi 0, %s19
    %s33 = sphi 0, %s35
    %s36 = sphi 0, %s33
    %s37 = sphi 0, %s36
    %s53 = sphi 0, %s37
    %s57 = sphi 0, %s57
    %s59 = sphi 0, %s57
    %s60 = sphi 0, %s59
    %s74 = sphi 0, %s60
    %s78 = sphi 0, %s78
    %s80 = sphi 0, %s78
    %s81 = sphi 0, %s80
    %s95 = sphi 0, %s81
    %s103 = sphi 0, %s105
    %s106 = sphi 0, %s103
    %s107 = sphi 0, %s106
    %s123 = sphi 0, %s107
  $region4: #{upsample_conv_transpose2d.1} parent=0 // loop_header_branch
    %12 = sbr.rel (%p10) target = $region8
  $region5: #{upsample_conv_transpose2d.1} parent=0 // loop_body
    %s14 = ssub.s32 %s9, 1
    %s15 = ssub.s32 %s9, 2
    %s22 = sadd.s32 1, %s17
    %p23 = scmp.ge.s32.totalorder %s22, 1
    %s24 = scalar_select %p23, 0, %s22
    %s25 = sadd.s32 1, %s16
    %s26 = scalar_select %p23, %s25, %s16
    %p27 = scmp.ge.s32.totalorder %s26, 2
    %s28 = scalar_select %p27, 0, %s26
    %s29 = ssub.s32 %s16, %s28
    %s30 = ssub.s32 %s17, %s24
    %s31 = sor.u32 %s29, %s30
    %p32 = scmp.eq.s32.totalorder %s31, 0
    %s34 = sadd.s32 %s33, 1
    %s35 = scalar_select %p32, %s33, %s34
    %p38 = pneg %p32
    %p39 = scmp.eq.s32.totalorder %s9, 1
    %p40 = por %p38, %p39
    %p41 = scmp.ne.s32.totalorder %s33, %s36
    %p42 = scmp.eq.s32.totalorder %s9, 0
    %p43 = por %p41, %p42
    %p44 = scmp.ne.s32.totalorder %s33, %s36
    %p45 = scmp.eq.s32.totalorder %s14, 1
    %p46 = por %p44, %p45
    %p47 = scmp.ne.s32.totalorder %s36, %s37
    %p48 = scmp.eq.s32.totalorder %s14, 0
    %p49 = por %p47, %p48
    %p50 = scmp.ne.s32.totalorder %s36, %s37
    %p51 = scmp.eq.s32.totalorder %s15, 1
    %p52 = por %p50, %p51
    %p54 = scmp.ne.s32.totalorder %s37, %s53
    %p55 = scmp.eq.s32.totalorder %s15, 0
    %p56 = por %p54, %p55
    %s58 = sadd.s32 %s57, 1
    %p61 = scmp.eq.s32.totalorder %s9, 1
    %p62 = scmp.ne.s32.totalorder %s57, %s59
    %p63 = scmp.eq.s32.totalorder %s9, 0
    %p64 = por %p62, %p63
    %p65 = scmp.ne.s32.totalorder %s57, %s59
    %p66 = scmp.eq.s32.totalorder %s14, 1
    %p67 = por %p65, %p66
    %p68 = scmp.ne.s32.totalorder %s59, %s60
    %p69 = scmp.eq.s32.totalorder %s14, 0
    %p70 = por %p68, %p69
    %p71 = scmp.ne.s32.totalorder %s59, %s60
    %p72 = scmp.eq.s32.totalorder %s15, 1
    %p73 = por %p71, %p72
    %p75 = scmp.ne.s32.totalorder %s60, %s74
    %p76 = scmp.eq.s32.totalorder %s15, 0
    %p77 = por %p75, %p76
    %s79 = sadd.s32 %s78, 1
    %p82 = scmp.eq.s32.totalorder %s9, 1
    %p83 = scmp.ne.s32.totalorder %s78, %s80
    %p84 = scmp.eq.s32.totalorder %s9, 0
    %p85 = por %p83, %p84
    %p86 = scmp.ne.s32.totalorder %s78, %s80
    %p87 = scmp.eq.s32.totalorder %s14, 1
    %p88 = por %p86, %p87
    %p89 = scmp.ne.s32.totalorder %s80, %s81
    %p90 = scmp.eq.s32.totalorder %s14, 0
    %p91 = por %p89, %p90
    %p92 = scmp.ne.s32.totalorder %s80, %s81
    %p93 = scmp.eq.s32.totalorder %s15, 1
    %p94 = por %p92, %p93
    %p96 = scmp.ne.s32.totalorder %s81, %s95
    %p97 = scmp.eq.s32.totalorder %s15, 0
    %p98 = por %p96, %p97
    %s99 = ssub.s32 %s16, %s28
    %s100 = ssub.s32 %s17, %s24
    %s101 = sor.u32 %s99, %s100
    %p102 = scmp.eq.s32.totalorder %s101, 0
    %s104 = sadd.s32 %s103, 1
    %s105 = scalar_select %p102, %s103, %s104
    %p108 = pneg %p102
    %p109 = scmp.eq.s32.totalorder %s9, 1
    %p110 = por %p108, %p109
    %p111 = scmp.ne.s32.totalorder %s103, %s106
    %p112 = scmp.eq.s32.totalorder %s9, 0
    %p113 = por %p111, %p112
    %p114 = scmp.ne.s32.totalorder %s103, %s106
    %p115 = scmp.eq.s32.totalorder %s14, 1
    %p116 = por %p114, %p115
    %p117 = scmp.ne.s32.totalorder %s106, %s107
    %p118 = scmp.eq.s32.totalorder %s14, 0
    %p119 = por %p117, %p118
    %p120 = scmp.ne.s32.totalorder %s106, %s107
    %p121 = scmp.eq.s32.totalorder %s15, 1
    %p122 = por %p120, %p121
    %p124 = scmp.ne.s32.totalorder %s107, %s123
    %p125 = scmp.eq.s32.totalorder %s15, 0
    %p126 = por %p124, %p125
    %p127 = scmp.le.s32.totalorder 1, %s9
    %p128 = scmp.lt.s32.totalorder %s9, 3
    %p129 = pnand %p127, %p128
    %p130 = pneg %p129
    // Predicated region
    $region9: #{upsample_conv_transpose2d.1} parent=5 // pred_check
      _
    $region10: #{upsample_conv_transpose2d.1} parent=5 // pred_check_branch
      %132 = sbr.rel (%p129) target = $region12
    $region11: #{upsample_conv_transpose2d.1} parent=5 // pred_region
      %s133 = ssub.s32 %s9, 1
      // Predicated region
      $region13: #{upsample_conv_transpose2d.1} parent=11 // pred_check
        %p134 = pneg %p70
      $region14: #{upsample_conv_transpose2d.1} parent=11 // pred_check_branch
        %136 = sbr.rel (%p134) target = $region16
      $region15: #{upsample_conv_transpose2d.1} parent=11 // pred_region
        _
      $region16: #{upsample_conv_transpose2d.1} parent=11 // pred_fallthru
        _
      // Predicated region
      $region17: #{upsample_conv_transpose2d.1} parent=11 // pred_check
        %p137 = pneg %p91
      $region18: #{upsample_conv_transpose2d.1} parent=11 // pred_check_branch
        %139 = sbr.rel (%p137) target = $region20
      $region19: #{upsample_conv_transpose2d.1} parent=11 // pred_region
        _
      $region20: #{upsample_conv_transpose2d.1} parent=11 // pred_fallthru
        _
    $region12: #{upsample_conv_transpose2d.1} parent=5 // pred_fallthru
      _
    %p140 = scmp.lt.s32.totalorder %s9, 2
    // Predicated region
    $region21: #{upsample_conv_transpose2d.1} parent=5 // pred_check
      %p141 = pneg %p140
    $region22: #{upsample_conv_transpose2d.1} parent=5 // pred_check_branch
      %143 = sbr.rel (%p141) target = $region24
    $region23: #{upsample_conv_transpose2d.1} parent=5 // pred_region
      // Predicated region
      $region25: #{upsample_conv_transpose2d.1} parent=23 // pred_check
        %p144 = pneg %p43
      $region26: #{upsample_conv_transpose2d.1} parent=23 // pred_check_branch
        %146 = sbr.rel (%p144) target = $region28
      $region27: #{upsample_conv_transpose2d.1} parent=23 // pred_region
        %s147 = smul.u32 2, %s17
        %p148 = scmp.lt.s32.totalorder %s16, 1
        %s149 = scalar_select %p148, %s16, 1
        %p150 = scmp.lt.s32.totalorder %s147, 1
        %s151 = scalar_select %p150, %s147, 1
        %s152 = smul.addr %s149, 2
        %s153 = sadd.s32 %s151, %s152
        %s154 = smul.addr %s153, 4
        %s155 = scalar_lea.vmem %s0, %s154
        %s156 = smul.u32 2, %s17
      $region28: #{upsample_conv_transpose2d.1} parent=23 // pred_fallthru
        _
    $region24: #{upsample_conv_transpose2d.1} parent=5 // pred_fallthru
      _
    %p157 = scmp.le.s32.totalorder 1, %s9
    %p158 = scmp.lt.s32.totalorder %s9, 3
    %p159 = pnand %p157, %p158
    %p160 = pneg %p159
    // Predicated region
    $region29: #{upsample_conv_transpose2d.1} parent=5 // pred_check
      _
    $region30: #{upsample_conv_transpose2d.1} parent=5 // pred_check_branch
      %162 = sbr.rel (%p159) target = $region32
    $region31: #{upsample_conv_transpose2d.1} parent=5 // pred_region
      %s163 = ssub.s32 %s9, 1
      %s164 = smul.u32 2, %s19
      %p165 = scmp.lt.s32.totalorder %s18, 1
      %s166 = scalar_select %p165, %s18, 1
      %p167 = scmp.lt.s32.totalorder %s164, 1
      %s168 = scalar_select %p167, %s164, 1
      %s169 = smul.addr %s166, 2
      %s170 = sadd.s32 %s168, %s169
      %s171 = smul.addr %s170, 4
      %s172 = scalar_lea.vmem %s0, %s171
      %p173 = pneg %p49
      %p174 = pneg %p46
      %p175 = pneg %p70
      %p176 = pneg %p67
      %p177 = pneg %p91
      %p178 = pneg %p88
      %p179 = pneg %p119
      %p180 = pneg %p116
      %s181 = smul.u32 2, %s19
      %p182 = scmp.lt.s32.totalorder %s18, 1
      %s183 = scalar_select %p182, %s18, 1
      %p184 = scmp.lt.s32.totalorder %s181, 1
      %s185 = scalar_select %p184, %s181, 1
      %s186 = smul.addr %s183, 8
      %s187 = sadd.s32 %s185, %s186
      %s188 = smul.addr %s187, 8
      %s189 = scalar_lea.vmem %s3, %s188
      %s190 = smul.u32 2, %s19
      %p191 = scmp.lt.s32.totalorder %s18, 1
      %s192 = scalar_select %p191, %s18, 1
      %p193 = scmp.lt.s32.totalorder %s190, 1
      %s194 = scalar_select %p193, %s190, 1
      %s195 = smul.addr %s192, 2
      %s196 = sadd.s32 %s194, %s195
      %s197 = smul.addr %s196, 4
      %s198 = scalar_lea.vmem %s0, %s197
      %s199 = smul.u32 2, %s19
      %s200 = smul.u32 2, %s19
      %p201 = scmp.lt.s32.totalorder %s18, 1
      %s202 = scalar_select %p201, %s18, 1
      %p203 = scmp.lt.s32.totalorder %s200, 1
      %s204 = scalar_select %p203, %s200, 1
      %s205 = smul.addr %s202, 8
      %s206 = sadd.s32 %s204, %s205
      %s207 = smul.addr %s206, 8
      %s208 = scalar_lea.vmem %s3, %s207
      %s209 = smul.u32 2, %s19
      %v210 = vld [vmem:[%s198] sm:$0xff]
      %v211 = vld [vmem:[%s1] sm:$0xff]
      %v212 = vld [vmem:[%s1 + $0x8] sm:$0xff]
      %v213 = vld [vmem:[%s1 + $0x10] sm:$0xff]
      %v214 = vld [vmem:[%s1 + $0x18] sm:$0xff]
      %v215 = vld [vmem:[%s2] sm:$0xff]
      %v216 = vld [vmem:[%s2 + $0x8] sm:$0xff]
      %v217 = vld [vmem:[%s2 + $0x10] sm:$0xff]
      %v218 = vld [vmem:[%s2 + $0x18] sm:$0xff]
      %220 = vset.pattern.permute.xlu0 0
      %221 = vperm.xlu0 %220, %v211
      %v222 = vpop.permute.xlu0 %221
      %225 = vset.pattern.permute.xlu0 0
      %226 = vperm.xlu0 %225, %v212
      %v227 = vpop.permute.xlu0 %226
      %230 = vset.pattern.permute.xlu0 0
      %231 = vperm.xlu0 %230, %v213
      %v232 = vpop.permute.xlu0 %231
      %235 = vset.pattern.permute.xlu0 0
      %236 = vperm.xlu0 %235, %v214
      %v237 = vpop.permute.xlu0 %236
      %v240 = vperm.slane %v210, 0
      %v241 = vperm.slane %v210, 4
      %v244 = vperm.slane %v240, 0
      %v245 = vperm.slane %v241, 0
      %v246 = vmul.f32 %v222, %v244
      %v247 = vmul.f32 %v222, %v245
      %v248 = vmul.f32 %v227, %v244
      %v249 = vmul.f32 %v227, %v245
      %v250 = vmul.f32 %v232, %v244
      %v251 = vmul.f32 %v232, %v245
      %v252 = vmul.f32 %v237, %v244
      %v253 = vmul.f32 %v237, %v245
      %254 = vset.pattern.permute.xlu0 1
      %255 = vperm.xlu0 %254, %v211
      %v256 = vpop.permute.xlu0 %255
      %258 = vset.pattern.permute.xlu0 1
      %259 = vperm.xlu0 %258, %v212
      %v260 = vpop.permute.xlu0 %259
      %262 = vset.pattern.permute.xlu0 1
      %263 = vperm.xlu0 %262, %v213
      %v264 = vpop.permute.xlu0 %263
      %266 = vset.pattern.permute.xlu0 1
      %267 = vperm.xlu0 %266, %v214
      %v268 = vpop.permute.xlu0 %267
      %v270 = vperm.slane %v210, 1
      %v271 = vperm.slane %v210, 5
      %v274 = vperm.slane %v270, 1
      %v275 = vperm.slane %v271, 1
      %v276 = vmul.f32 %v256, %v274
      %v277 = vmul.f32 %v256, %v275
      %v278 = vmul.f32 %v260, %v274
      %v279 = vmul.f32 %v260, %v275
      %v280 = vmul.f32 %v264, %v274
      %v281 = vmul.f32 %v264, %v275
      %v282 = vmul.f32 %v268, %v274
      %v283 = vmul.f32 %v268, %v275
      %v284 = vadd.f32 %v246, %v276
      %v285 = vadd.f32 %v247, %v277
      %v286 = vadd.f32 %v248, %v278
      %v287 = vadd.f32 %v249, %v279
      %v288 = vadd.f32 %v250, %v280
      %v289 = vadd.f32 %v251, %v281
      %v290 = vadd.f32 %v252, %v282
      %v291 = vadd.f32 %v253, %v283
      %292 = vset.pattern.permute.xlu0 2
      %293 = vperm.xlu0 %292, %v211
      %v294 = vpop.permute.xlu0 %293
      %296 = vset.pattern.permute.xlu0 2
      %297 = vperm.xlu0 %296, %v212
      %v298 = vpop.permute.xlu0 %297
      %300 = vset.pattern.permute.xlu0 2
      %301 = vperm.xlu0 %300, %v213
      %v302 = vpop.permute.xlu0 %301
      %304 = vset.pattern.permute.xlu0 2
      %305 = vperm.xlu0 %304, %v214
      %v306 = vpop.permute.xlu0 %305
      %v308 = vperm.slane %v210, 2
      %v309 = vperm.slane %v210, 6
      %v312 = vperm.slane %v308, 2
      %v313 = vperm.slane %v309, 2
      %v314 = vmul.f32 %v294, %v312
      %v315 = vmul.f32 %v294, %v313
      %v316 = vmul.f32 %v298, %v312
      %v317 = vmul.f32 %v298, %v313
      %v318 = vmul.f32 %v302, %v312
      %v319 = vmul.f32 %v302, %v313
      %v320 = vmul.f32 %v306, %v312
      %v321 = vmul.f32 %v306, %v313
      %v322 = vadd.f32 %v284, %v314
      %v323 = vadd.f32 %v285, %v315
      %v324 = vadd.f32 %v286, %v316
      %v325 = vadd.f32 %v287, %v317
      %v326 = vadd.f32 %v288, %v318
      %v327 = vadd.f32 %v289, %v319
      %v328 = vadd.f32 %v290, %v320
      %v329 = vadd.f32 %v291, %v321
      %330 = vset.pattern.permute.xlu0 3
      %331 = vperm.xlu0 %330, %v211
      %v332 = vpop.permute.xlu0 %331
      %334 = vset.pattern.permute.xlu0 3
      %335 = vperm.xlu0 %334, %v212
      %v336 = vpop.permute.xlu0 %335
      %338 = vset.pattern.permute.xlu0 3
      %339 = vperm.xlu0 %338, %v213
      %v340 = vpop.permute.xlu0 %339
      %342 = vset.pattern.permute.xlu0 3
      %343 = vperm.xlu0 %342, %v214
      %v344 = vpop.permute.xlu0 %343
      %v346 = vperm.slane %v210, 3
      %v347 = vperm.slane %v210, 7
      %v350 = vperm.slane %v346, 3
      %v351 = vperm.slane %v347, 3
      %v352 = vmul.f32 %v332, %v350
      %v353 = vmul.f32 %v332, %v351
      %v354 = vmul.f32 %v336, %v350
      %v355 = vmul.f32 %v336, %v351
      %v356 = vmul.f32 %v340, %v350
      %v357 = vmul.f32 %v340, %v351
      %v358 = vmul.f32 %v344, %v350
      %v359 = vmul.f32 %v344, %v351
      %v360 = vadd.f32 %v322, %v352
      %v361 = vadd.f32 %v323, %v353
      %v362 = vadd.f32 %v324, %v354
      %v363 = vadd.f32 %v325, %v355
      %v364 = vadd.f32 %v326, %v356
      %v365 = vadd.f32 %v327, %v357
      %v366 = vadd.f32 %v328, %v358
      %v367 = vadd.f32 %v329, %v359
      %369 = vset.pattern.permute.xlu0 0
      %370 = vperm.xlu0 %369, %v215
      %v371 = vpop.permute.xlu0 %370
      %374 = vset.pattern.permute.xlu0 0
      %375 = vperm.xlu0 %374, %v216
      %v376 = vpop.permute.xlu0 %375
      %379 = vset.pattern.permute.xlu0 0
      %380 = vperm.xlu0 %379, %v217
      %v381 = vpop.permute.xlu0 %380
      %384 = vset.pattern.permute.xlu0 0
      %385 = vperm.xlu0 %384, %v218
      %v386 = vpop.permute.xlu0 %385
      %v388 = vadd.f32 %v360, %v371
      %v389 = vadd.f32 %v361, %v371
      %v390 = vadd.f32 %v362, %v376
      %v391 = vadd.f32 %v363, %v376
      %v392 = vadd.f32 %v364, %v381
      %v393 = vadd.f32 %v365, %v381
      %v394 = vadd.f32 %v366, %v386
      %v395 = vadd.f32 %v367, %v386
      %396 = vst [vmem:[%s208] sm:$0xff] %v388
      %397 = vst [vmem:[%s208 + $0x8] sm:$0xff] %v389
      %398 = vst [vmem:[%s208 + $0x10] sm:$0xff] %v390
      %399 = vst [vmem:[%s208 + $0x18] sm:$0xff] %v391
      %400 = vst [vmem:[%s208 + $0x20] sm:$0xff] %v392
      %401 = vst [vmem:[%s208 + $0x28] sm:$0xff] %v393
      %402 = vst [vmem:[%s208 + $0x30] sm:$0xff] %v394
      %403 = vst [vmem:[%s208 + $0x38] sm:$0xff] %v395
      %s404 = smul.u32 2, %s19
      %p405 = scmp.lt.s32.totalorder %s18, 1
      %s406 = scalar_select %p405, %s18, 1
      %p407 = scmp.lt.s32.totalorder %s404, 1
      %s408 = scalar_select %p407, %s404, 1
      %s409 = smul.addr %s406, 8
      %s410 = sadd.s32 %s408, %s409
      %s411 = smul.addr %s410, 8
      %s412 = scalar_lea.vmem %s3, %s411
      // Predicated region
      $region33: #{upsample_conv_transpose2d.1} parent=31 // pred_check
        %p413 = pneg %p116
      $region34: #{upsample_conv_transpose2d.1} parent=31 // pred_check_branch
        %415 = sbr.rel (%p413) target = $region36
      $region35: #{upsample_conv_transpose2d.1} parent=31 // pred_region
        %s416 = smul.u32 2, %s19
      $region36: #{upsample_conv_transpose2d.1} parent=31 // pred_fallthru
        _
    $region32: #{upsample_conv_transpose2d.1} parent=5 // pred_fallthru
      _
    %p417 = scmp.le.s32.totalorder 2, %s9
    // Predicated region
    $region37: #{upsample_conv_transpose2d.1} parent=5 // pred_check
      %p418 = pneg %p417
    $region38: #{upsample_conv_transpose2d.1} parent=5 // pred_check_branch
      %420 = sbr.rel (%p418) target = $region40
    $region39: #{upsample_conv_transpose2d.1} parent=5 // pred_region
      %s421 = ssub.s32 %s9, 2
      // Predicated region
      $region41: #{upsample_conv_transpose2d.1} parent=39 // pred_check
        %p422 = pneg %p122
      $region42: #{upsample_conv_transpose2d.1} parent=39 // pred_check_branch
        %424 = sbr.rel (%p422) target = $region44
      $region43: #{upsample_conv_transpose2d.1} parent=39 // pred_region
        %s425 = smul.u32 2, %s21
        %p426 = scmp.lt.s32.totalorder %s20, 1
        %s427 = scalar_select %p426, %s20, 1
        %p428 = scmp.lt.s32.totalorder %s425, 1
        %s429 = scalar_select %p428, %s425, 1
        %s430 = smul.addr %s427, 8
        %s431 = sadd.s32 %s429, %s430
        %s432 = smul.addr %s431, 8
        %s433 = scalar_lea.vmem %s3, %s432
      $region44: #{upsample_conv_transpose2d.1} parent=39 // pred_fallthru
        _
    $region40: #{upsample_conv_transpose2d.1} parent=5 // pred_fallthru
      _
  $region6: #{upsample_conv_transpose2d.1} parent=0 // loop_footer
    %s13 = sadd.s32 1, %s9
  $region7: #{upsample_conv_transpose2d.1} parent=0 // loop_footer_branch
    %8 = sbr.rel target = $region3
  $region8: #{upsample_conv_transpose2d.1} parent=0 // loop_exit
    _

</llo_original>
